<compile_context>
chip_gen: v7x
topology: tpu7x:2x2x1
jax: 0.10.0
libtpu: 0.0.40
codegen_flags: <defaults>
</compile_context>

<pallas_src>
import functools

import jax
import jax.numpy as jnp
from jax.experimental import pallas as pl
from jax.experimental.pallas import tpu as pltpu


def dueling_dqn_kernel(x_ref,
                       w0_ref, b0_ref,
                       w1_ref, b1_ref,
                       wva_ref, bva_ref,
                       whead_ref, bhead_ref,
                       q_ref):
    bf16 = jnp.bfloat16
    f32 = jnp.float32

    # Shared trunk: Linear + ReLU stack. bf16 MXU operands, f32 accumulate/elementwise.
    h = jnp.dot(x_ref[...], w0_ref[...], preferred_element_type=f32) + b0_ref[...]
    h = jnp.maximum(h, 0.0)
    h = jnp.dot(h.astype(bf16), w1_ref[...], preferred_element_type=f32) + b1_ref[...]
    h = jnp.maximum(h, 0.0)

    # Fused value|advantage hidden layer: one (64, 64) matmul instead of two (64, 32).
    va = jnp.dot(h.astype(bf16), wva_ref[...], preferred_element_type=f32) + bva_ref[...]
    va = jnp.maximum(va, 0.0)

    # Fused heads: block-diagonal (64, 1+A) weight -> column 0 is V, columns 1: are adv.
    head = jnp.dot(va.astype(bf16), whead_ref[...], preferred_element_type=f32) + bhead_ref[...]
    v = head[:, :1]           # (TILE_B, 1)
    a = head[:, 1:]           # (TILE_B, A)  -- exactly A columns, no padding in the mean

    # Dueling aggregation in f32.
    q_ref[...] = (v + a - jnp.mean(a, axis=1, keepdims=True)).astype(q_ref.dtype)


def _round_up(n, m):
    return ((n + m - 1) // m) * m


@functools.partial(jax.jit, static_argnames=("tile_b",))
def dueling_dqn_forward(x, params, tile_b=128):
    """x: (B, input_dim) f32; params: dict of (in, out) weights and (1, out) biases."""
    bf16 = jnp.bfloat16
    f32 = jnp.float32

    B, D = x.shape
    A = params["wao"].shape[1]
    H = params["wv"].shape[1]          # dueling hidden width (32)

    # --- Fuse + cast parameters (matmul operands bf16, biases f32) ---------------
    w0 = params["w0"].astype(bf16)
    b0 = params["b0"].astype(f32)
    w1 = params["w1"].astype(bf16)
    b1 = params["b1"].astype(f32)
    wva = jnp.concatenate([params["wv"], params["wa"]], axis=1).astype(bf16)   # (L1, 2H)
    bva = jnp.concatenate([params["bv"], params["ba"]], axis=1).astype(f32)    # (1, 2H)
    whead = jnp.zeros((2 * H, 1 + A), f32)
    whead = whead.at[:H, :1].set(params["wvo"])
    whead = whead.at[H:, 1:].set(params["wao"])
    whead = whead.astype(bf16)                                                 # (2H, 1+A)
    bhead = jnp.concatenate([params["bvo"], params["bao"]], axis=1).astype(f32)

    # --- Batch tiling: TILE_B multiple of 8, pad batch to a multiple of it -------
    tile_b = max(8, min(int(tile_b), _round_up(B, 8)))
    tile_b = _round_up(tile_b, 8)
    B_pad = _round_up(B, tile_b)
    x_bf = x.astype(bf16)
    if B_pad != B:
        x_bf = jnp.pad(x_bf, ((0, B_pad - B), (0, 0)))
    grid = (B_pad // tile_b,)

    batch_map = lambda i: (i, 0)
    const_map = lambda i: (0, 0)   # weights stay resident across batch tiles

    in_specs = [
        pl.BlockSpec((tile_b, D), batch_map),
        pl.BlockSpec(w0.shape, const_map), pl.BlockSpec(b0.shape, const_map),
        pl.BlockSpec(w1.shape, const_map), pl.BlockSpec(b1.shape, const_map),
        pl.BlockSpec(wva.shape, const_map), pl.BlockSpec(bva.shape, const_map),
        pl.BlockSpec(whead.shape, const_map), pl.BlockSpec(bhead.shape, const_map),
    ]
    out_specs = pl.BlockSpec((tile_b, A), batch_map)

    # Advisory cost estimate for XLA scheduling.
    L0 = w0.shape[1]
    L1 = w1.shape[1]
    flops = 2 * B_pad * (D * L0 + L0 * L1 + L1 * (2 * H) + (2 * H) * (1 + A))
    weight_bytes = sum(int(w.size) * 2 for w in (w0, w1, wva, whead)) \
        + sum(int(b.size) * 4 for b in (b0, b1, bva, bhead))
    bytes_accessed = int(x_bf.size) * 2 + B_pad * A * 4 + weight_bytes

    q_pad = pl.pallas_call(
        dueling_dqn_kernel,
        out_shape=jax.ShapeDtypeStruct((B_pad, A), f32),
        grid=grid,
        in_specs=in_specs,
        out_specs=out_specs,
        compiler_params=pltpu.CompilerParams(dimension_semantics=("parallel",)),
        cost_estimate=pl.CostEstimate(flops=flops, transcendentals=0,
                                      bytes_accessed=bytes_accessed),
    )(x_bf, w0, b0, w1, b1, wva, bva, whead, bhead)

    return q_pad[:B]


def init_params(key, input_dim, layers, dueling_layers, num_actions):
    """Deterministic synthetic init. Weights stored as (in, out) = PyTorch (out, in)^T."""
    sizes = [
        ("w0", "b0", input_dim, layers[0]),
        ("w1", "b1", layers[0], layers[1]),
        ("wv", "bv", layers[-1], dueling_layers[0]),
        ("wa", "ba", layers[-1], dueling_layers[0]),
        ("wvo", "bvo", dueling_layers[-1], 1),
        ("wao", "bao", dueling_layers[-1], num_actions),
    ]
    params = {}
    for wname, bname, fan_in, fan_out in sizes:
        key, kw, kb = jax.random.split(key, 3)
        bound = 1.0 / jnp.sqrt(jnp.float32(fan_in))  # PyTorch Linear default init range
        params[wname] = jax.random.uniform(kw, (fan_in, fan_out), jnp.float32, -bound, bound)
        params[bname] = jax.random.uniform(kb, (1, fan_out), jnp.float32, -bound, bound)
    return params


def reference_forward(x, params):
    """Plain-JAX reference reproducing the PyTorch forward with the same bf16
    operand quantization (f32 accumulate / f32 elementwise) as the kernel."""
    bf16 = jnp.bfloat16
    f32 = jnp.float32

    def dense(z, w, b):
        return jnp.dot(z.astype(bf16), w.astype(bf16), preferred_element_type=f32) + b

    h = jnp.maximum(dense(x, params["w0"], params["b0"]), 0.0)
    h = jnp.maximum(dense(h, params["w1"], params["b1"]), 0.0)
    v = jnp.maximum(dense(h, params["wv"], params["bv"]), 0.0)
    v = dense(v, params["wvo"], params["bvo"])
    a = jnp.maximum(dense(h, params["wa"], params["ba"]), 0.0)
    a = dense(a, params["wao"], params["bao"])
    return v + a - jnp.mean(a, axis=1, keepdims=True)


if __name__ == "__main__":
    INPUT_DIM = 16
    LAYERS = [64, 64]
    DUELING_LAYERS = [32]
    NUM_ACTIONS = 6
    BATCH = 72          # not a multiple of the tile -> exercises pad + 3-step grid
    TILE_B = 32

    key = jax.random.PRNGKey(0)
    key, kx = jax.random.split(key)
    x = jax.random.normal(kx, (BATCH, INPUT_DIM), jnp.float32)
    params = init_params(key, INPUT_DIM, LAYERS, DUELING_LAYERS, NUM_ACTIONS)

    q = dueling_dqn_forward(x, params, tile_b=TILE_B)
    q = jax.block_until_ready(q)

    q_ref = reference_forward(x, params)
    assert q.shape == (BATCH, NUM_ACTIONS)
    assert jnp.allclose(q, q_ref, atol=2e-3, rtol=2e-3), "mismatch vs reference"

    print("KERNEL_OK")
</pallas_src>

<mosaic_0001>
module attributes {stable_mosaic.version = 11 : i64} {
  func.func @dueling_dqn_kernel(%arg0: i32, %arg1: memref<32x16xbf16, #tpu.memory_space<vmem>>, %arg2: memref<16x64xbf16, #tpu.memory_space<vmem>>, %arg3: memref<1x64xf32, #tpu.memory_space<vmem>>, %arg4: memref<64x64xbf16, #tpu.memory_space<vmem>>, %arg5: memref<1x64xf32, #tpu.memory_space<vmem>>, %arg6: memref<64x64xbf16, #tpu.memory_space<vmem>>, %arg7: memref<1x64xf32, #tpu.memory_space<vmem>>, %arg8: memref<64x7xbf16, #tpu.memory_space<vmem>>, %arg9: memref<1x7xf32, #tpu.memory_space<vmem>>, %arg10: memref<32x6xf32, #tpu.memory_space<vmem>>) attributes {dimension_semantics = [#tpu.dimension_semantics<parallel>], iteration_bounds = array<i64: 3>, scalar_prefetch = 0 : i64, scratch_operands = 0 : i64, tpu.core_type = #tpu.core_type<tc>, window_params = [{transform_indices = @transform_0, window_bounds = array<i64: 32, 16>}, {pipeline_mode = #tpu.pipeline_mode<synchronous>, transform_indices = @transform_1, window_bounds = array<i64: 16, 64>}, {pipeline_mode = #tpu.pipeline_mode<synchronous>, transform_indices = @transform_2, window_bounds = array<i64: 1, 64>}, {pipeline_mode = #tpu.pipeline_mode<synchronous>, transform_indices = @transform_3, window_bounds = array<i64: 64, 64>}, {pipeline_mode = #tpu.pipeline_mode<synchronous>, transform_indices = @transform_4, window_bounds = array<i64: 1, 64>}, {pipeline_mode = #tpu.pipeline_mode<synchronous>, transform_indices = @transform_5, window_bounds = array<i64: 64, 64>}, {pipeline_mode = #tpu.pipeline_mode<synchronous>, transform_indices = @transform_6, window_bounds = array<i64: 1, 64>}, {pipeline_mode = #tpu.pipeline_mode<synchronous>, transform_indices = @transform_7, window_bounds = array<i64: 64, 7>}, {pipeline_mode = #tpu.pipeline_mode<synchronous>, transform_indices = @transform_8, window_bounds = array<i64: 1, 7>}, {transform_indices = @transform_9, window_bounds = array<i64: 32, 6>}]} {
    %c0 = arith.constant 0 : index
    %c0_0 = arith.constant 0 : index
    %0 = vector.load %arg1[%c0, %c0_0] : memref<32x16xbf16, #tpu.memory_space<vmem>>, vector<32x16xbf16>
    %c0_1 = arith.constant 0 : index
    %c0_2 = arith.constant 0 : index
    %1 = vector.load %arg2[%c0_1, %c0_2] : memref<16x64xbf16, #tpu.memory_space<vmem>>, vector<16x64xbf16>
    %cst = arith.constant dense<0.000000e+00> : vector<32x64xf32>
    %2 = tpu.matmul %0, %1, %cst {dimension_numbers = #tpu.dot_dimension_numbers<[1], [0], [0], [1], [0, 0, 1, 1], [], []>} : vector<32x16xbf16>, vector<16x64xbf16>, vector<32x64xf32> -> vector<32x64xf32>
    %c0_3 = arith.constant 0 : index
    %c0_4 = arith.constant 0 : index
    %3 = vector.load %arg3[%c0_3, %c0_4] : memref<1x64xf32, #tpu.memory_space<vmem>>, vector<1x64xf32>
    %4 = vector.broadcast %3 : vector<1x64xf32> to vector<32x64xf32>
    %5 = arith.addf %2, %4 : vector<32x64xf32>
    %cst_5 = arith.constant 0.000000e+00 : f32
    %6 = vector.broadcast %cst_5 : f32 to vector<32x64xf32>
    %7 = arith.maximumf %5, %6 : vector<32x64xf32>
    %8 = arith.truncf %7 : vector<32x64xf32> to vector<32x64xbf16>
    %c0_6 = arith.constant 0 : index
    %c0_7 = arith.constant 0 : index
    %9 = vector.load %arg4[%c0_6, %c0_7] : memref<64x64xbf16, #tpu.memory_space<vmem>>, vector<64x64xbf16>
    %cst_8 = arith.constant dense<0.000000e+00> : vector<32x64xf32>
    %10 = tpu.matmul %8, %9, %cst_8 {dimension_numbers = #tpu.dot_dimension_numbers<[1], [0], [0], [1], [0, 0, 1, 1], [], []>} : vector<32x64xbf16>, vector<64x64xbf16>, vector<32x64xf32> -> vector<32x64xf32>
    %c0_9 = arith.constant 0 : index
    %c0_10 = arith.constant 0 : index
    %11 = vector.load %arg5[%c0_9, %c0_10] : memref<1x64xf32, #tpu.memory_space<vmem>>, vector<1x64xf32>
    %12 = vector.broadcast %11 : vector<1x64xf32> to vector<32x64xf32>
    %13 = arith.addf %10, %12 : vector<32x64xf32>
    %cst_11 = arith.constant 0.000000e+00 : f32
    %14 = vector.broadcast %cst_11 : f32 to vector<32x64xf32>
    %15 = arith.maximumf %13, %14 : vector<32x64xf32>
    %16 = arith.truncf %15 : vector<32x64xf32> to vector<32x64xbf16>
    %c0_12 = arith.constant 0 : index
    %c0_13 = arith.constant 0 : index
    %17 = vector.load %arg6[%c0_12, %c0_13] : memref<64x64xbf16, #tpu.memory_space<vmem>>, vector<64x64xbf16>
    %cst_14 = arith.constant dense<0.000000e+00> : vector<32x64xf32>
    %18 = tpu.matmul %16, %17, %cst_14 {dimension_numbers = #tpu.dot_dimension_numbers<[1], [0], [0], [1], [0, 0, 1, 1], [], []>} : vector<32x64xbf16>, vector<64x64xbf16>, vector<32x64xf32> -> vector<32x64xf32>
    %c0_15 = arith.constant 0 : index
    %c0_16 = arith.constant 0 : index
    %19 = vector.load %arg7[%c0_15, %c0_16] : memref<1x64xf32, #tpu.memory_space<vmem>>, vector<1x64xf32>
    %20 = vector.broadcast %19 : vector<1x64xf32> to vector<32x64xf32>
    %21 = arith.addf %18, %20 : vector<32x64xf32>
    %cst_17 = arith.constant 0.000000e+00 : f32
    %22 = vector.broadcast %cst_17 : f32 to vector<32x64xf32>
    %23 = arith.maximumf %21, %22 : vector<32x64xf32>
    %24 = arith.truncf %23 : vector<32x64xf32> to vector<32x64xbf16>
    %c0_18 = arith.constant 0 : index
    %c0_19 = arith.constant 0 : index
    %25 = vector.load %arg8[%c0_18, %c0_19] : memref<64x7xbf16, #tpu.memory_space<vmem>>, vector<64x7xbf16>
    %cst_20 = arith.constant dense<0.000000e+00> : vector<32x7xf32>
    %26 = tpu.matmul %24, %25, %cst_20 {dimension_numbers = #tpu.dot_dimension_numbers<[1], [0], [0], [1], [0, 0, 1, 1], [], []>} : vector<32x64xbf16>, vector<64x7xbf16>, vector<32x7xf32> -> vector<32x7xf32>
    %c0_21 = arith.constant 0 : index
    %c0_22 = arith.constant 0 : index
    %27 = vector.load %arg9[%c0_21, %c0_22] : memref<1x7xf32, #tpu.memory_space<vmem>>, vector<1x7xf32>
    %28 = vector.broadcast %27 : vector<1x7xf32> to vector<32x7xf32>
    %29 = arith.addf %26, %28 : vector<32x7xf32>
    %30 = vector.extract_strided_slice %29 {offsets = [0, 0], sizes = [32, 1], strides = [1, 1]} : vector<32x7xf32> to vector<32x1xf32>
    %31 = vector.extract_strided_slice %29 {offsets = [0, 1], sizes = [32, 6], strides = [1, 1]} : vector<32x7xf32> to vector<32x6xf32>
    %32 = vector.broadcast %30 : vector<32x1xf32> to vector<32x6xf32>
    %33 = arith.addf %32, %31 : vector<32x6xf32>
    %cst_23 = arith.constant dense<0.000000e+00> : vector<32xf32>
    %34 = vector.multi_reduction <add>, %31, %cst_23 [1] : vector<32x6xf32> to vector<32xf32>
    %35 = vector.shape_cast %34 : vector<32xf32> to vector<32x1xf32>
    %cst_24 = arith.constant 6.000000e+00 : f32
    %36 = vector.broadcast %cst_24 : f32 to vector<32x1xf32>
    %37 = arith.divf %35, %36 : vector<32x1xf32>
    %38 = vector.broadcast %37 : vector<32x1xf32> to vector<32x6xf32>
    %39 = arith.subf %33, %38 : vector<32x6xf32>
    %c0_25 = arith.constant 0 : index
    %c0_26 = arith.constant 0 : index
    %40 = vector.load %arg10[%c0_25, %c0_26] : memref<32x6xf32, #tpu.memory_space<vmem>>, vector<32x6xf32>
    tpu.vector_store %arg10[%c0_25, %c0_26], %39 {strides = array<i32>} : memref<32x6xf32, #tpu.memory_space<vmem>>, vector<32x6xf32>,
    return
  }
  func.func @transform_0(%arg0: i32) -> (i32, i32) {
    %c0_i32 = arith.constant 0 : i32
    %c0_i32_0 = arith.constant 0 : i32
    return %arg0, %c0_i32 : i32, i32
  }
  func.func @transform_1(%arg0: i32) -> (i32, i32) {
    %c0_i32 = arith.constant 0 : i32
    %c0_i32_0 = arith.constant 0 : i32
    %c0_i32_1 = arith.constant 0 : i32
    return %c0_i32, %c0_i32_0 : i32, i32
  }
  func.func @transform_2(%arg0: i32) -> (i32, i32) {
    %c0_i32 = arith.constant 0 : i32
    %c0_i32_0 = arith.constant 0 : i32
    %c0_i32_1 = arith.constant 0 : i32
    return %c0_i32, %c0_i32_0 : i32, i32
  }
  func.func @transform_3(%arg0: i32) -> (i32, i32) {
    %c0_i32 = arith.constant 0 : i32
    %c0_i32_0 = arith.constant 0 : i32
    %c0_i32_1 = arith.constant 0 : i32
    return %c0_i32, %c0_i32_0 : i32, i32
  }
  func.func @transform_4(%arg0: i32) -> (i32, i32) {
    %c0_i32 = arith.constant 0 : i32
    %c0_i32_0 = arith.constant 0 : i32
    %c0_i32_1 = arith.constant 0 : i32
    return %c0_i32, %c0_i32_0 : i32, i32
  }
  func.func @transform_5(%arg0: i32) -> (i32, i32) {
    %c0_i32 = arith.constant 0 : i32
    %c0_i32_0 = arith.constant 0 : i32
    %c0_i32_1 = arith.constant 0 : i32
    return %c0_i32, %c0_i32_0 : i32, i32
  }
  func.func @transform_6(%arg0: i32) -> (i32, i32) {
    %c0_i32 = arith.constant 0 : i32
    %c0_i32_0 = arith.constant 0 : i32
    %c0_i32_1 = arith.constant 0 : i32
    return %c0_i32, %c0_i32_0 : i32, i32
  }
  func.func @transform_7(%arg0: i32) -> (i32, i32) {
    %c0_i32 = arith.constant 0 : i32
    %c0_i32_0 = arith.constant 0 : i32
    %c0_i32_1 = arith.constant 0 : i32
    return %c0_i32, %c0_i32_0 : i32, i32
  }
  func.func @transform_8(%arg0: i32) -> (i32, i32) {
    %c0_i32 = arith.constant 0 : i32
    %c0_i32_0 = arith.constant 0 : i32
    %c0_i32_1 = arith.constant 0 : i32
    return %c0_i32, %c0_i32_0 : i32, i32
  }
  func.func @transform_9(%arg0: i32) -> (i32, i32) {
    %c0_i32 = arith.constant 0 : i32
    %c0_i32_0 = arith.constant 0 : i32
    return %arg0, %c0_i32 : i32, i32
  }
}

</mosaic_0001>

<llo_original>
// kernel: dueling_dqn_forward.1
$region0: #{dueling_dqn_forward.1}
  #allocation0 [shape = 'u32[]', space=smem, size = 0x4, offset = 0x4, fixed_abs, tag = 'smem constant byte address 0x4 - core index']
  #allocation1 [shape = 'u32[144,128]{1,0:T(1,128)}', space=vmem, size = 0x12000, scoped, tag = 'internal scratch']
  %s0 = inlined_call_operand.vmem [shape: bf16[96,16], index: 0, kind: input, shape index: {}]
  %s1 = inlined_call_operand.vmem [shape: bf16[16,64], index: 1, kind: input, shape index: {}]
  %s2 = inlined_call_operand.vmem [shape: f32[1,64], index: 2, kind: input, shape index: {}]
  %s3 = inlined_call_operand.vmem [shape: bf16[64,64], index: 3, kind: input, shape index: {}]
  %s4 = inlined_call_operand.vmem [shape: f32[1,64], index: 4, kind: input, shape index: {}]
  %s5 = inlined_call_operand.vmem [shape: bf16[64,64], index: 5, kind: input, shape index: {}]
  %s6 = inlined_call_operand.vmem [shape: f32[1,64], index: 6, kind: input, shape index: {}]
  %s7 = inlined_call_operand.vmem [shape: bf16[64,7], index: 7, kind: input, shape index: {}]
  %s8 = inlined_call_operand.vmem [shape: f32[1,7], index: 8, kind: input, shape index: {}]
  %s9 = inlined_call_operand.vmem [shape: f32[96,6], index: 9, kind: output, shape index: {}]
  %s10 = sld [smem:[#allocation0]]
  $region69: #{dueling_dqn_forward.1} parent=0
    _
  %s12 = ssub.s32 1, %s10
  %s13 = scalar_select 0, %s12, %s10
  loop: start=0, step=1, limit=5
  $region2: #{dueling_dqn_forward.1} parent=0 // loop_pre_header
    _
  $region3: #{dueling_dqn_forward.1} parent=0 // loop_header
    %s15 = sphi 0, %s19
    %p16 = scmp.ge.s32.totalorder %s15, 5
    %s25 = sphi 0, %s27
    %s28 = sphi 0, %s25
    %s29 = sphi 0, %s28
    %s45 = sphi 0, %s29
    %s49 = sphi 0, %s49
    %s51 = sphi 0, %s49
    %s52 = sphi 0, %s51
    %s66 = sphi 0, %s52
    %s70 = sphi 0, %s70
    %s72 = sphi 0, %s70
    %s73 = sphi 0, %s72
    %s87 = sphi 0, %s73
    %s91 = sphi 0, %s91
    %s93 = sphi 0, %s91
    %s94 = sphi 0, %s93
    %s108 = sphi 0, %s94
    %s112 = sphi 0, %s112
    %s114 = sphi 0, %s112
    %s115 = sphi 0, %s114
    %s129 = sphi 0, %s115
    %s133 = sphi 0, %s133
    %s135 = sphi 0, %s133
    %s136 = sphi 0, %s135
    %s150 = sphi 0, %s136
    %s154 = sphi 0, %s154
    %s156 = sphi 0, %s154
    %s157 = sphi 0, %s156
    %s171 = sphi 0, %s157
    %s175 = sphi 0, %s175
    %s177 = sphi 0, %s175
    %s178 = sphi 0, %s177
    %s192 = sphi 0, %s178
    %s196 = sphi 0, %s196
    %s198 = sphi 0, %s196
    %s199 = sphi 0, %s198
    %s213 = sphi 0, %s199
    %s219 = sphi 0, %s221
    %s222 = sphi 0, %s219
    %s223 = sphi 0, %s222
    %s239 = sphi 0, %s223
  $region4: #{dueling_dqn_forward.1} parent=0 // loop_header_branch
    %18 = sbr.rel (%p16) target = $region8
  $region5: #{dueling_dqn_forward.1} parent=0 // loop_body
    %s20 = ssub.s32 %s15, 1
    %s21 = ssub.s32 %s15, 2
    %s22 = sadd.s32 %s15, 1
    %s23 = ssub.s32 %s15, %s22
    %p24 = scmp.eq.s32.totalorder %s23, 0
    %s26 = sadd.s32 %s25, 1
    %s27 = scalar_select %p24, %s25, %s26
    %p30 = pneg %p24
    %p31 = scmp.eq.s32.totalorder %s15, 2
    %p32 = por %p30, %p31
    %p33 = scmp.ne.s32.totalorder %s25, %s28
    %p34 = scmp.eq.s32.totalorder %s15, 0
    %p35 = por %p33, %p34
    %p36 = scmp.ne.s32.totalorder %s25, %s28
    %p37 = scmp.eq.s32.totalorder %s20, 2
    %p38 = por %p36, %p37
    %p39 = scmp.ne.s32.totalorder %s28, %s29
    %p40 = scmp.eq.s32.totalorder %s20, 0
    %p41 = por %p39, %p40
    %p42 = scmp.ne.s32.totalorder %s28, %s29
    %p43 = scmp.eq.s32.totalorder %s21, 2
    %p44 = por %p42, %p43
    %p46 = scmp.ne.s32.totalorder %s29, %s45
    %p47 = scmp.eq.s32.totalorder %s21, 0
    %p48 = por %p46, %p47
    %s50 = sadd.s32 %s49, 1
    %p53 = scmp.eq.s32.totalorder %s15, 2
    %p54 = scmp.ne.s32.totalorder %s49, %s51
    %p55 = scmp.eq.s32.totalorder %s15, 0
    %p56 = por %p54, %p55
    %p57 = scmp.ne.s32.totalorder %s49, %s51
    %p58 = scmp.eq.s32.totalorder %s20, 2
    %p59 = por %p57, %p58
    %p60 = scmp.ne.s32.totalorder %s51, %s52
    %p61 = scmp.eq.s32.totalorder %s20, 0
    %p62 = por %p60, %p61
    %p63 = scmp.ne.s32.totalorder %s51, %s52
    %p64 = scmp.eq.s32.totalorder %s21, 2
    %p65 = por %p63, %p64
    %p67 = scmp.ne.s32.totalorder %s52, %s66
    %p68 = scmp.eq.s32.totalorder %s21, 0
    %p69 = por %p67, %p68
    %s71 = sadd.s32 %s70, 1
    %p74 = scmp.eq.s32.totalorder %s15, 2
    %p75 = scmp.ne.s32.totalorder %s70, %s72
    %p76 = scmp.eq.s32.totalorder %s15, 0
    %p77 = por %p75, %p76
    %p78 = scmp.ne.s32.totalorder %s70, %s72
    %p79 = scmp.eq.s32.totalorder %s20, 2
    %p80 = por %p78, %p79
    %p81 = scmp.ne.s32.totalorder %s72, %s73
    %p82 = scmp.eq.s32.totalorder %s20, 0
    %p83 = por %p81, %p82
    %p84 = scmp.ne.s32.totalorder %s72, %s73
    %p85 = scmp.eq.s32.totalorder %s21, 2
    %p86 = por %p84, %p85
    %p88 = scmp.ne.s32.totalorder %s73, %s87
    %p89 = scmp.eq.s32.totalorder %s21, 0
    %p90 = por %p88, %p89
    %s92 = sadd.s32 %s91, 1
    %p95 = scmp.eq.s32.totalorder %s15, 2
    %p96 = scmp.ne.s32.totalorder %s91, %s93
    %p97 = scmp.eq.s32.totalorder %s15, 0
    %p98 = por %p96, %p97
    %p99 = scmp.ne.s32.totalorder %s91, %s93
    %p100 = scmp.eq.s32.totalorder %s20, 2
    %p101 = por %p99, %p100
    %p102 = scmp.ne.s32.totalorder %s93, %s94
    %p103 = scmp.eq.s32.totalorder %s20, 0
    %p104 = por %p102, %p103
    %p105 = scmp.ne.s32.totalorder %s93, %s94
    %p106 = scmp.eq.s32.totalorder %s21, 2
    %p107 = por %p105, %p106
    %p109 = scmp.ne.s32.totalorder %s94, %s108
    %p110 = scmp.eq.s32.totalorder %s21, 0
    %p111 = por %p109, %p110
    %s113 = sadd.s32 %s112, 1
    %p116 = scmp.eq.s32.totalorder %s15, 2
    %p117 = scmp.ne.s32.totalorder %s112, %s114
    %p118 = scmp.eq.s32.totalorder %s15, 0
    %p119 = por %p117, %p118
    %p120 = scmp.ne.s32.totalorder %s112, %s114
    %p121 = scmp.eq.s32.totalorder %s20, 2
    %p122 = por %p120, %p121
    %p123 = scmp.ne.s32.totalorder %s114, %s115
    %p124 = scmp.eq.s32.totalorder %s20, 0
    %p125 = por %p123, %p124
    %p126 = scmp.ne.s32.totalorder %s114, %s115
    %p127 = scmp.eq.s32.totalorder %s21, 2
    %p128 = por %p126, %p127
    %p130 = scmp.ne.s32.totalorder %s115, %s129
    %p131 = scmp.eq.s32.totalorder %s21, 0
    %p132 = por %p130, %p131
    %s134 = sadd.s32 %s133, 1
    %p137 = scmp.eq.s32.totalorder %s15, 2
    %p138 = scmp.ne.s32.totalorder %s133, %s135
    %p139 = scmp.eq.s32.totalorder %s15, 0
    %p140 = por %p138, %p139
    %p141 = scmp.ne.s32.totalorder %s133, %s135
    %p142 = scmp.eq.s32.totalorder %s20, 2
    %p143 = por %p141, %p142
    %p144 = scmp.ne.s32.totalorder %s135, %s136
    %p145 = scmp.eq.s32.totalorder %s20, 0
    %p146 = por %p144, %p145
    %p147 = scmp.ne.s32.totalorder %s135, %s136
    %p148 = scmp.eq.s32.totalorder %s21, 2
    %p149 = por %p147, %p148
    %p151 = scmp.ne.s32.totalorder %s136, %s150
    %p152 = scmp.eq.s32.totalorder %s21, 0
    %p153 = por %p151, %p152
    %s155 = sadd.s32 %s154, 1
    %p158 = scmp.eq.s32.totalorder %s15, 2
    %p159 = scmp.ne.s32.totalorder %s154, %s156
    %p160 = scmp.eq.s32.totalorder %s15, 0
    %p161 = por %p159, %p160
    %p162 = scmp.ne.s32.totalorder %s154, %s156
    %p163 = scmp.eq.s32.totalorder %s20, 2
    %p164 = por %p162, %p163
    %p165 = scmp.ne.s32.totalorder %s156, %s157
    %p166 = scmp.eq.s32.totalorder %s20, 0
    %p167 = por %p165, %p166
    %p168 = scmp.ne.s32.totalorder %s156, %s157
    %p169 = scmp.eq.s32.totalorder %s21, 2
    %p170 = por %p168, %p169
    %p172 = scmp.ne.s32.totalorder %s157, %s171
    %p173 = scmp.eq.s32.totalorder %s21, 0
    %p174 = por %p172, %p173
    %s176 = sadd.s32 %s175, 1
    %p179 = scmp.eq.s32.totalorder %s15, 2
    %p180 = scmp.ne.s32.totalorder %s175, %s177
    %p181 = scmp.eq.s32.totalorder %s15, 0
    %p182 = por %p180, %p181
    %p183 = scmp.ne.s32.totalorder %s175, %s177
    %p184 = scmp.eq.s32.totalorder %s20, 2
    %p185 = por %p183, %p184
    %p186 = scmp.ne.s32.totalorder %s177, %s178
    %p187 = scmp.eq.s32.totalorder %s20, 0
    %p188 = por %p186, %p187
    %p189 = scmp.ne.s32.totalorder %s177, %s178
    %p190 = scmp.eq.s32.totalorder %s21, 2
    %p191 = por %p189, %p190
    %p193 = scmp.ne.s32.totalorder %s178, %s192
    %p194 = scmp.eq.s32.totalorder %s21, 0
    %p195 = por %p193, %p194
    %s197 = sadd.s32 %s196, 1
    %p200 = scmp.eq.s32.totalorder %s15, 2
    %p201 = scmp.ne.s32.totalorder %s196, %s198
    %p202 = scmp.eq.s32.totalorder %s15, 0
    %p203 = por %p201, %p202
    %p204 = scmp.ne.s32.totalorder %s196, %s198
    %p205 = scmp.eq.s32.totalorder %s20, 2
    %p206 = por %p204, %p205
    %p207 = scmp.ne.s32.totalorder %s198, %s199
    %p208 = scmp.eq.s32.totalorder %s20, 0
    %p209 = por %p207, %p208
    %p210 = scmp.ne.s32.totalorder %s198, %s199
    %p211 = scmp.eq.s32.totalorder %s21, 2
    %p212 = por %p210, %p211
    %p214 = scmp.ne.s32.totalorder %s199, %s213
    %p215 = scmp.eq.s32.totalorder %s21, 0
    %p216 = por %p214, %p215
    %s217 = ssub.s32 %s15, %s22
    %p218 = scmp.eq.s32.totalorder %s217, 0
    %s220 = sadd.s32 %s219, 1
    %s221 = scalar_select %p218, %s219, %s220
    %p224 = pneg %p218
    %p225 = scmp.eq.s32.totalorder %s15, 2
    %p226 = por %p224, %p225
    %p227 = scmp.ne.s32.totalorder %s219, %s222
    %p228 = scmp.eq.s32.totalorder %s15, 0
    %p229 = por %p227, %p228
    %p230 = scmp.ne.s32.totalorder %s219, %s222
    %p231 = scmp.eq.s32.totalorder %s20, 2
    %p232 = por %p230, %p231
    %p233 = scmp.ne.s32.totalorder %s222, %s223
    %p234 = scmp.eq.s32.totalorder %s20, 0
    %p235 = por %p233, %p234
    %p236 = scmp.ne.s32.totalorder %s222, %s223
    %p237 = scmp.eq.s32.totalorder %s21, 2
    %p238 = por %p236, %p237
    %p240 = scmp.ne.s32.totalorder %s223, %s239
    %p241 = scmp.eq.s32.totalorder %s21, 0
    %p242 = por %p240, %p241
    %p243 = scmp.le.s32.totalorder 1, %s15
    %p244 = scmp.lt.s32.totalorder %s15, 4
    %p245 = pnand %p243, %p244
    %p246 = pneg %p245
    // Predicated region
    $region9: #{dueling_dqn_forward.1} parent=5 // pred_check
      _
    $region10: #{dueling_dqn_forward.1} parent=5 // pred_check_branch
      %248 = sbr.rel (%p245) target = $region12
    $region11: #{dueling_dqn_forward.1} parent=5 // pred_region
      %s249 = ssub.s32 %s15, 1
      // Predicated region
      $region13: #{dueling_dqn_forward.1} parent=11 // pred_check
        %p250 = pneg %p62
      $region14: #{dueling_dqn_forward.1} parent=11 // pred_check_branch
        %252 = sbr.rel (%p250) target = $region16
      $region15: #{dueling_dqn_forward.1} parent=11 // pred_region
        _
      $region16: #{dueling_dqn_forward.1} parent=11 // pred_fallthru
        _
      // Predicated region
      $region17: #{dueling_dqn_forward.1} parent=11 // pred_check
        %p253 = pneg %p83
      $region18: #{dueling_dqn_forward.1} parent=11 // pred_check_branch
        %255 = sbr.rel (%p253) target = $region20
      $region19: #{dueling_dqn_forward.1} parent=11 // pred_region
        _
      $region20: #{dueling_dqn_forward.1} parent=11 // pred_fallthru
        _
      // Predicated region
      $region21: #{dueling_dqn_forward.1} parent=11 // pred_check
        %p256 = pneg %p104
      $region22: #{dueling_dqn_forward.1} parent=11 // pred_check_branch
        %258 = sbr.rel (%p256) target = $region24
      $region23: #{dueling_dqn_forward.1} parent=11 // pred_region
        _
      $region24: #{dueling_dqn_forward.1} parent=11 // pred_fallthru
        _
      // Predicated region
      $region25: #{dueling_dqn_forward.1} parent=11 // pred_check
        %p259 = pneg %p125
      $region26: #{dueling_dqn_forward.1} parent=11 // pred_check_branch
        %261 = sbr.rel (%p259) target = $region28
      $region27: #{dueling_dqn_forward.1} parent=11 // pred_region
        _
      $region28: #{dueling_dqn_forward.1} parent=11 // pred_fallthru
        _
      // Predicated region
      $region29: #{dueling_dqn_forward.1} parent=11 // pred_check
        %p262 = pneg %p146
      $region30: #{dueling_dqn_forward.1} parent=11 // pred_check_branch
        %264 = sbr.rel (%p262) target = $region32
      $region31: #{dueling_dqn_forward.1} parent=11 // pred_region
        _
      $region32: #{dueling_dqn_forward.1} parent=11 // pred_fallthru
        _
      // Predicated region
      $region33: #{dueling_dqn_forward.1} parent=11 // pred_check
        %p265 = pneg %p167
      $region34: #{dueling_dqn_forward.1} parent=11 // pred_check_branch
        %267 = sbr.rel (%p265) target = $region36
      $region35: #{dueling_dqn_forward.1} parent=11 // pred_region
        _
      $region36: #{dueling_dqn_forward.1} parent=11 // pred_fallthru
        _
      // Predicated region
      $region37: #{dueling_dqn_forward.1} parent=11 // pred_check
        %p268 = pneg %p188
      $region38: #{dueling_dqn_forward.1} parent=11 // pred_check_branch
        %270 = sbr.rel (%p268) target = $region40
      $region39: #{dueling_dqn_forward.1} parent=11 // pred_region
        _
      $region40: #{dueling_dqn_forward.1} parent=11 // pred_fallthru
        _
      // Predicated region
      $region41: #{dueling_dqn_forward.1} parent=11 // pred_check
        %p271 = pneg %p209
      $region42: #{dueling_dqn_forward.1} parent=11 // pred_check_branch
        %273 = sbr.rel (%p271) target = $region44
      $region43: #{dueling_dqn_forward.1} parent=11 // pred_region
        _
      $region44: #{dueling_dqn_forward.1} parent=11 // pred_fallthru
        _
    $region12: #{dueling_dqn_forward.1} parent=5 // pred_fallthru
      _
    %p274 = scmp.lt.s32.totalorder %s15, 3
    // Predicated region
    $region45: #{dueling_dqn_forward.1} parent=5 // pred_check
      %p275 = pneg %p274
    $region46: #{dueling_dqn_forward.1} parent=5 // pred_check_branch
      %277 = sbr.rel (%p275) target = $region48
    $region47: #{dueling_dqn_forward.1} parent=5 // pred_region
      // Predicated region
      $region49: #{dueling_dqn_forward.1} parent=47 // pred_check
        %p278 = pneg %p35
      $region50: #{dueling_dqn_forward.1} parent=47 // pred_check_branch
        %280 = sbr.rel (%p278) target = $region52
      $region51: #{dueling_dqn_forward.1} parent=47 // pred_region
        %s281 = smul.u32 4, %s15
        %p282 = scmp.lt.s32.totalorder %s281, 11
        %s283 = scalar_select %p282, %s281, 11
        %s284 = smul.addr %s283, 4
        %s285 = scalar_lea.vmem %s0, %s284
        %s286 = smul.u32 4, %s15
      $region52: #{dueling_dqn_forward.1} parent=47 // pred_fallthru
        _
    $region48: #{dueling_dqn_forward.1} parent=5 // pred_fallthru
      _
    %p287 = scmp.le.s32.totalorder 1, %s15
    %p288 = scmp.lt.s32.totalorder %s15, 4
    %p289 = pnand %p287, %p288
    %p290 = pneg %p289
    // Predicated region
    $region53: #{dueling_dqn_forward.1} parent=5 // pred_check
      _
    $region54: #{dueling_dqn_forward.1} parent=5 // pred_check_branch
      %292 = sbr.rel (%p289) target = $region56
    $region55: #{dueling_dqn_forward.1} parent=5 // pred_region
      %s293 = ssub.s32 %s15, 1
      %s294 = smul.u32 4, %s20
      %p295 = scmp.lt.s32.totalorder %s294, 11
      %s296 = scalar_select %p295, %s294, 11
      %s297 = smul.addr %s296, 4
      %s298 = scalar_lea.vmem %s0, %s297
      %p299 = pneg %p41
      %p300 = pneg %p38
      %p301 = pneg %p62
      %p302 = pneg %p59
      %p303 = pneg %p83
      %p304 = pneg %p80
      %p305 = pneg %p104
      %p306 = pneg %p101
      %p307 = pneg %p125
      %p308 = pneg %p122
      %p309 = pneg %p146
      %p310 = pneg %p143
      %p311 = pneg %p167
      %p312 = pneg %p164
      %p313 = pneg %p188
      %p314 = pneg %p185
      %p315 = pneg %p209
      %p316 = pneg %p206
      %p317 = pneg %p235
      %p318 = pneg %p232
      %s319 = smul.u32 4, %s20
      %p320 = scmp.lt.s32.totalorder %s319, 11
      %s321 = scalar_select %p320, %s319, 11
      %s322 = smul.addr %s321, 8
      %s323 = scalar_lea.vmem %s9, %s322
      %s324 = smul.u32 4, %s20
      %p325 = scmp.lt.s32.totalorder %s324, 11
      %s326 = scalar_select %p325, %s324, 11
      %s327 = smul.addr %s326, 4
      %s328 = scalar_lea.vmem %s0, %s327
      %s329 = smul.u32 4, %s20
      %s330 = smul.u32 4, %s20
      %p331 = scmp.lt.s32.totalorder %s330, 11
      %s332 = scalar_select %p331, %s330, 11
      %s333 = smul.addr %s332, 8
      %s334 = scalar_lea.vmem %s9, %s333
      %s335 = smul.u32 4, %s20
      %v337 = vld [vmem:[%s328] sm:$0xf]
      %v338 = vld [vmem:[%s328 + $0x4] sm:$0xf]
      %v339 = vld [vmem:[%s328 + $0x8] sm:$0xf]
      %v340 = vld [vmem:[%s328 + $0xc] sm:$0xf]
      %v341 = vld [vmem:[%s1] sm:$0xf]
      %v342 = vld [vmem:[%s1 + $0x4] sm:$0xf]
      %v343 = vld [vmem:[%s2] sm:$0x1]
      %v345 = vlaneseq
      %v346 = vshrl.u32 %v345, 7
      %v347 = vsub.s32 0, %v346
      %v348 = vrot.slane %v343, %v347
      %v354 = vunpack.c.l.b16 %v337
      %v355 = vunpack.c.l.b16 %v338
      %v356 = vunpack.c.l.b16 %v339
      %v357 = vunpack.c.l.b16 %v340
      %v358 = vpack.c.b16 %v355, %v354
      %v359 = vpack.c.b16 %v357, %v356
      %v362 = vunpack.c.l.b16 %v341
      %v363 = vunpack.c.l.b16 %v342
      %v364 = vpack.c.b16 %v363, %v362
      %vm366 = vcmask 130048
      %v368 = vsel %vm366, %v358, 0
      %v371 = vsel %vm366, %v359, 0
      %373 = vmatprep.subr.bf16.mxu0 0
      %374 = vmatpush1.bf16.msra.mxu0 %v364
      %375 = vmatprep.subr.bf16.mxu0 0
      %376 = vmatpush1.bf16.msra.mxu0 0
      %377 = vmatprep.subr.bf16.mxu0 0
      %378 = vmatpush1.bf16.msra.mxu0 0
      %379 = vmatprep.subr.bf16.mxu0 0
      %380 = vmatpush1.bf16.msra.mxu0 0
      %381 = vmatprep.subr.bf16.mxu0 0
      %382 = vmatpush1.bf16.msra.mxu0 0
      %383 = vmatprep.subr.bf16.mxu0 0
      %384 = vmatpush1.bf16.msra.mxu0 0
      %385 = vmatprep.subr.bf16.mxu0 0
      %386 = vmatpush1.bf16.msra.mxu0 0
      %387 = vmatprep.subr.bf16.mxu0 0
      %388 = vmatpush1.bf16.msra.mxu0 0
      %389 = vmatprep.subr.bf16.mxu0 0
      %390 = vmatpush1.bf16.msra.mxu0 0
      %391 = vmatprep.subr.bf16.mxu0 0
      %392 = vmatpush1.bf16.msra.mxu0 0
      %393 = vmatprep.subr.bf16.mxu0 0
      %394 = vmatpush1.bf16.msra.mxu0 0
      %395 = vmatprep.subr.bf16.mxu0 0
      %396 = vmatpush1.bf16.msra.mxu0 0
      %397 = vmatprep.subr.bf16.mxu0 0
      %398 = vmatpush1.bf16.msra.mxu0 0
      %399 = vmatprep.subr.bf16.mxu0 0
      %400 = vmatpush1.bf16.msra.mxu0 0
      %401 = vmatprep.subr.bf16.mxu0 0
      %402 = vmatpush1.bf16.msra.mxu0 0
      %403 = vmatprep.subr.bf16.mxu0 0
      %404 = vmatpush1.bf16.msra.mxu0 0
      %405 = vmatprep.mubr.bf16.mxu0 0
      %406 = vmatmul.mubr.bf16.gmra.mrb[0].mxu0 %v368
      %v407 = vpop.f32.mrb[0].mxu0
      %v408 = vadd.f32 %v348, %v407
      %v409 = vpop.f32.mrb[0].mxu0
      %v410 = vpop.f32.mrb[0].mxu0
      %v411 = vadd.f32 %v348, %v410
      %v412 = vpop.f32.mrb[0].mxu0
      %413 = vmatprep.mubr.bf16.mxu0 0
      %414 = vmatmul.mubr.bf16.gmra.mrb[0].mxu0 %v371
      %v415 = vpop.f32.mrb[0].mxu0
      %v416 = vadd.f32 %v348, %v415
      %v417 = vpop.f32.mrb[0].mxu0
      %v418 = vpop.f32.mrb[0].mxu0
      %v419 = vadd.f32 %v348, %v418
      %v420 = vpop.f32.mrb[0].mxu0
      %421 = vdwg.mxu0
      %v422 = vmax.f32 %v408, 0.0
      %v423 = vmax.f32 %v411, 0.0
      %v424 = vmax.f32 %v416, 0.0
      %v425 = vmax.f32 %v419, 0.0
      %v426 = vpack.c.bf16 %v423, %v422
      %v427 = vpack.c.bf16 %v425, %v424
      %v428 = vld [vmem:[%s3] sm:$0xf]
      %v429 = vld [vmem:[%s3 + $0x4] sm:$0xf]
      %v430 = vld [vmem:[%s3 + $0x8] sm:$0xf]
      %v431 = vld [vmem:[%s3 + $0xc] sm:$0xf]
      %v432 = vld [vmem:[%s3 + $0x10] sm:$0xf]
      %v433 = vld [vmem:[%s3 + $0x14] sm:$0xf]
      %v434 = vld [vmem:[%s3 + $0x18] sm:$0xf]
      %v435 = vld [vmem:[%s3 + $0x1c] sm:$0xf]
      %v436 = vld [vmem:[%s4] sm:$0x1]
      %v438 = vlaneseq
      %v439 = vshrl.u32 %v438, 7
      %v440 = vsub.s32 0, %v439
      %v441 = vrot.slane %v436, %v440
      %v451 = vunpack.c.l.b16 %v428
      %v452 = vunpack.c.l.b16 %v429
      %v453 = vunpack.c.l.b16 %v430
      %v454 = vunpack.c.l.b16 %v431
      %v455 = vunpack.c.l.b16 %v432
      %v456 = vunpack.c.l.b16 %v433
      %v457 = vunpack.c.l.b16 %v434
      %v458 = vunpack.c.l.b16 %v435
      %v459 = vpack.c.b16 %v452, %v451
      %v460 = vpack.c.b16 %v454, %v453
      %v461 = vpack.c.b16 %v456, %v455
      %v462 = vpack.c.b16 %v458, %v457
      %vm467 = vcmask 523264
      %v469 = vsel %vm467, %v426, 0
      %v472 = vsel %vm467, %v427, 0
      %474 = vmatprep.subr.bf16.mxu0 0
      %475 = vmatpush1.bf16.msra.mxu0 %v459
      %476 = vmatprep.subr.bf16.mxu0 0
      %477 = vmatpush1.bf16.msra.mxu0 %v460
      %478 = vmatprep.subr.bf16.mxu0 0
      %479 = vmatpush1.bf16.msra.mxu0 %v461
      %480 = vmatprep.subr.bf16.mxu0 0
      %481 = vmatpush1.bf16.msra.mxu0 %v462
      %482 = vmatprep.subr.bf16.mxu0 0
      %483 = vmatpush1.bf16.msra.mxu0 0
      %484 = vmatprep.subr.bf16.mxu0 0
      %485 = vmatpush1.bf16.msra.mxu0 0
      %486 = vmatprep.subr.bf16.mxu0 0
      %487 = vmatpush1.bf16.msra.mxu0 0
      %488 = vmatprep.subr.bf16.mxu0 0
      %489 = vmatpush1.bf16.msra.mxu0 0
      %490 = vmatprep.subr.bf16.mxu0 0
      %491 = vmatpush1.bf16.msra.mxu0 0
      %492 = vmatprep.subr.bf16.mxu0 0
      %493 = vmatpush1.bf16.msra.mxu0 0
      %494 = vmatprep.subr.bf16.mxu0 0
      %495 = vmatpush1.bf16.msra.mxu0 0
      %496 = vmatprep.subr.bf16.mxu0 0
      %497 = vmatpush1.bf16.msra.mxu0 0
      %498 = vmatprep.subr.bf16.mxu0 0
      %499 = vmatpush1.bf16.msra.mxu0 0
      %500 = vmatprep.subr.bf16.mxu0 0
      %501 = vmatpush1.bf16.msra.mxu0 0
      %502 = vmatprep.subr.bf16.mxu0 0
      %503 = vmatpush1.bf16.msra.mxu0 0
      %504 = vmatprep.subr.bf16.mxu0 0
      %505 = vmatpush1.bf16.msra.mxu0 0
      %506 = vmatprep.mubr.bf16.mxu0 0
      %507 = vmatmul.mubr.bf16.gmra.mrb[0].mxu0 %v469
      %v508 = vpop.f32.mrb[0].mxu0
      %v509 = vadd.f32 %v441, %v508
      %v510 = vpop.f32.mrb[0].mxu0
      %v511 = vpop.f32.mrb[0].mxu0
      %v512 = vadd.f32 %v441, %v511
      %v513 = vpop.f32.mrb[0].mxu0
      %514 = vmatprep.mubr.bf16.mxu0 0
      %515 = vmatmul.mubr.bf16.gmra.mrb[0].mxu0 %v472
      %v516 = vpop.f32.mrb[0].mxu0
      %v517 = vadd.f32 %v441, %v516
      %v518 = vpop.f32.mrb[0].mxu0
      %v519 = vpop.f32.mrb[0].mxu0
      %v520 = vadd.f32 %v441, %v519
      %v521 = vpop.f32.mrb[0].mxu0
      %522 = vdwg.mxu0
      %v523 = vmax.f32 %v509, 0.0
      %v524 = vmax.f32 %v512, 0.0
      %v525 = vmax.f32 %v517, 0.0
      %v526 = vmax.f32 %v520, 0.0
      %v527 = vpack.c.bf16 %v524, %v523
      %v528 = vpack.c.bf16 %v526, %v525
      %v529 = vld [vmem:[%s5] sm:$0xf]
      %v530 = vld [vmem:[%s5 + $0x4] sm:$0xf]
      %v531 = vld [vmem:[%s5 + $0x8] sm:$0xf]
      %v532 = vld [vmem:[%s5 + $0xc] sm:$0xf]
      %v533 = vld [vmem:[%s5 + $0x10] sm:$0xf]
      %v534 = vld [vmem:[%s5 + $0x14] sm:$0xf]
      %v535 = vld [vmem:[%s5 + $0x18] sm:$0xf]
      %v536 = vld [vmem:[%s5 + $0x1c] sm:$0xf]
      %v537 = vld [vmem:[%s6] sm:$0x1]
      %v539 = vlaneseq
      %v540 = vshrl.u32 %v539, 7
      %v541 = vsub.s32 0, %v540
      %v542 = vrot.slane %v537, %v541
      %v552 = vunpack.c.l.b16 %v529
      %v553 = vunpack.c.l.b16 %v530
      %v554 = vunpack.c.l.b16 %v531
      %v555 = vunpack.c.l.b16 %v532
      %v556 = vunpack.c.l.b16 %v533
      %v557 = vunpack.c.l.b16 %v534
      %v558 = vunpack.c.l.b16 %v535
      %v559 = vunpack.c.l.b16 %v536
      %v560 = vpack.c.b16 %v553, %v552
      %v561 = vpack.c.b16 %v555, %v554
      %v562 = vpack.c.b16 %v557, %v556
      %v563 = vpack.c.b16 %v559, %v558
      %v569 = vsel %vm467, %v527, 0
      %v572 = vsel %vm467, %v528, 0
      %574 = vmatprep.subr.bf16.mxu0 0
      %575 = vmatpush1.bf16.msra.mxu0 %v560
      %576 = vmatprep.subr.bf16.mxu0 0
      %577 = vmatpush1.bf16.msra.mxu0 %v561
      %578 = vmatprep.subr.bf16.mxu0 0
      %579 = vmatpush1.bf16.msra.mxu0 %v562
      %580 = vmatprep.subr.bf16.mxu0 0
      %581 = vmatpush1.bf16.msra.mxu0 %v563
      %582 = vmatprep.subr.bf16.mxu0 0
      %583 = vmatpush1.bf16.msra.mxu0 0
      %584 = vmatprep.subr.bf16.mxu0 0
      %585 = vmatpush1.bf16.msra.mxu0 0
      %586 = vmatprep.subr.bf16.mxu0 0
      %587 = vmatpush1.bf16.msra.mxu0 0
      %588 = vmatprep.subr.bf16.mxu0 0
      %589 = vmatpush1.bf16.msra.mxu0 0
      %590 = vmatprep.subr.bf16.mxu0 0
      %591 = vmatpush1.bf16.msra.mxu0 0
      %592 = vmatprep.subr.bf16.mxu0 0
      %593 = vmatpush1.bf16.msra.mxu0 0
      %594 = vmatprep.subr.bf16.mxu0 0
      %595 = vmatpush1.bf16.msra.mxu0 0
      %596 = vmatprep.subr.bf16.mxu0 0
      %597 = vmatpush1.bf16.msra.mxu0 0
      %598 = vmatprep.subr.bf16.mxu0 0
      %599 = vmatpush1.bf16.msra.mxu0 0
      %600 = vmatprep.subr.bf16.mxu0 0
      %601 = vmatpush1.bf16.msra.mxu0 0
      %602 = vmatprep.subr.bf16.mxu0 0
      %603 = vmatpush1.bf16.msra.mxu0 0
      %604 = vmatprep.subr.bf16.mxu0 0
      %605 = vmatpush1.bf16.msra.mxu0 0
      %606 = vmatprep.mubr.bf16.mxu0 0
      %607 = vmatmul.mubr.bf16.gmra.mrb[0].mxu0 %v569
      %v608 = vpop.f32.mrb[0].mxu0
      %v609 = vadd.f32 %v542, %v608
      %v610 = vpop.f32.mrb[0].mxu0
      %v611 = vpop.f32.mrb[0].mxu0
      %v612 = vadd.f32 %v542, %v611
      %v613 = vpop.f32.mrb[0].mxu0
      %614 = vmatprep.mubr.bf16.mxu0 0
      %615 = vmatmul.mubr.bf16.gmra.mrb[0].mxu0 %v572
      %v616 = vpop.f32.mrb[0].mxu0
      %v617 = vadd.f32 %v542, %v616
      %v618 = vpop.f32.mrb[0].mxu0
      %v619 = vpop.f32.mrb[0].mxu0
      %v620 = vadd.f32 %v542, %v619
      %v621 = vpop.f32.mrb[0].mxu0
      %622 = vdwg.mxu0
      %v623 = vmax.f32 %v609, 0.0
      %v624 = vmax.f32 %v612, 0.0
      %v625 = vmax.f32 %v617, 0.0
      %v626 = vmax.f32 %v620, 0.0
      %v627 = vpack.c.bf16 %v624, %v623
      %v628 = vpack.c.bf16 %v626, %v625
      %v629 = vld [vmem:[%s7] sm:$0xf]
      %v630 = vld [vmem:[%s7 + $0x4] sm:$0xf]
      %v631 = vld [vmem:[%s7 + $0x8] sm:$0xf]
      %v632 = vld [vmem:[%s7 + $0xc] sm:$0xf]
      %v633 = vld [vmem:[%s7 + $0x10] sm:$0xf]
      %v634 = vld [vmem:[%s7 + $0x14] sm:$0xf]
      %v635 = vld [vmem:[%s7 + $0x18] sm:$0xf]
      %v636 = vld [vmem:[%s7 + $0x1c] sm:$0xf]
      %v637 = vld [vmem:[%s8] sm:$0x1]
      %v639 = vlaneseq
      %v640 = vshrl.u32 %v639, 7
      %v641 = vsub.s32 0, %v640
      %v642 = vrot.slane %v637, %v641
      %v652 = vunpack.c.l.b16 %v629
      %v653 = vunpack.c.l.b16 %v630
      %v654 = vunpack.c.l.b16 %v631
      %v655 = vunpack.c.l.b16 %v632
      %v656 = vunpack.c.l.b16 %v633
      %v657 = vunpack.c.l.b16 %v634
      %v658 = vunpack.c.l.b16 %v635
      %v659 = vunpack.c.l.b16 %v636
      %v660 = vpack.c.b16 %v653, %v652
      %v661 = vpack.c.b16 %v655, %v654
      %v662 = vpack.c.b16 %v657, %v656
      %v663 = vpack.c.b16 %v659, %v658
      %v669 = vsel %vm467, %v627, 0
      %v672 = vsel %vm467, %v628, 0
      %674 = vmatprep.subr.bf16.mxu0 0
      %675 = vmatpush1.bf16.msra.mxu0 %v660
      %676 = vmatprep.subr.bf16.mxu0 0
      %677 = vmatpush1.bf16.msra.mxu0 %v661
      %678 = vmatprep.subr.bf16.mxu0 0
      %679 = vmatpush1.bf16.msra.mxu0 %v662
      %680 = vmatprep.subr.bf16.mxu0 0
      %681 = vmatpush1.bf16.msra.mxu0 %v663
      %682 = vmatprep.subr.bf16.mxu0 0
      %683 = vmatpush1.bf16.msra.mxu0 0
      %684 = vmatprep.subr.bf16.mxu0 0
      %685 = vmatpush1.bf16.msra.mxu0 0
      %686 = vmatprep.subr.bf16.mxu0 0
      %687 = vmatpush1.bf16.msra.mxu0 0
      %688 = vmatprep.subr.bf16.mxu0 0
      %689 = vmatpush1.bf16.msra.mxu0 0
      %690 = vmatprep.subr.bf16.mxu0 0
      %691 = vmatpush1.bf16.msra.mxu0 0
      %692 = vmatprep.subr.bf16.mxu0 0
      %693 = vmatpush1.bf16.msra.mxu0 0
      %694 = vmatprep.subr.bf16.mxu0 0
      %695 = vmatpush1.bf16.msra.mxu0 0
      %696 = vmatprep.subr.bf16.mxu0 0
      %697 = vmatpush1.bf16.msra.mxu0 0
      %698 = vmatprep.subr.bf16.mxu0 0
      %699 = vmatpush1.bf16.msra.mxu0 0
      %700 = vmatprep.subr.bf16.mxu0 0
      %701 = vmatpush1.bf16.msra.mxu0 0
      %702 = vmatprep.subr.bf16.mxu0 0
      %703 = vmatpush1.bf16.msra.mxu0 0
      %704 = vmatprep.subr.bf16.mxu0 0
      %705 = vmatpush1.bf16.msra.mxu0 0
      %706 = vmatprep.mubr.bf16.mxu0 0
      %707 = vmatmul.mubr.bf16.gmra.mrb[0].mxu0 %v669
      %v708 = vpop.f32.mrb[0].mxu0
      %v709 = vadd.f32 %v642, %v708
      %v710 = vpop.f32.mrb[0].mxu0
      %v711 = vpop.f32.mrb[0].mxu0
      %v712 = vadd.f32 %v642, %v711
      %v713 = vpop.f32.mrb[0].mxu0
      %714 = vmatprep.mubr.bf16.mxu0 0
      %715 = vmatmul.mubr.bf16.gmra.mrb[0].mxu0 %v672
      %v716 = vpop.f32.mrb[0].mxu0
      %v717 = vadd.f32 %v642, %v716
      %v718 = vpop.f32.mrb[0].mxu0
      %v719 = vpop.f32.mrb[0].mxu0
      %v720 = vadd.f32 %v642, %v719
      %v721 = vpop.f32.mrb[0].mxu0
      %722 = vdwg.mxu0
      %724 = vset.pattern.permute.xlu0 0
      %725 = vperm.xlu0 %724, %v709
      %v726 = vpop.permute.xlu0 %725
      %729 = vset.pattern.permute.xlu0 0
      %730 = vperm.xlu0 %729, %v712
      %v731 = vpop.permute.xlu0 %730
      %734 = vset.pattern.permute.xlu0 0
      %735 = vperm.xlu0 %734, %v717
      %v736 = vpop.permute.xlu0 %735
      %739 = vset.pattern.permute.xlu0 0
      %740 = vperm.xlu0 %739, %v720
      %v741 = vpop.permute.xlu0 %740
      %v743 = vadd.f32 %v726, %v709
      %v744 = vadd.f32 %v731, %v712
      %v745 = vadd.f32 %v736, %v717
      %v746 = vadd.f32 %v741, %v720
      %747 = vrot.lane.b32.xlu0 %v709, 127
      %v748 = vpop.permute.xlu0 %747
      %749 = vrot.lane.b32.xlu0 %v712, 127
      %v750 = vpop.permute.xlu0 %749
      %751 = vrot.lane.b32.xlu0 %v717, 127
      %v752 = vpop.permute.xlu0 %751
      %753 = vrot.lane.b32.xlu0 %v720, 127
      %v754 = vpop.permute.xlu0 %753
      %vm759 = vcmask 48128
      %v760 = vsel %vm759, %v748, 0.0
      %761 = vadd.xlane.f32.xlu0 %v760
      %v762 = vpop.xlane.xlu0 %761
      %v763 = vsel %vm759, %v750, 0.0
      %764 = vadd.xlane.f32.xlu0 %v763
      %v765 = vpop.xlane.xlu0 %764
      %v766 = vsel %vm759, %v752, 0.0
      %767 = vadd.xlane.f32.xlu0 %v766
      %v768 = vpop.xlane.xlu0 %767
      %v769 = vsel %vm759, %v754, 0.0
      %770 = vadd.xlane.f32.xlu0 %v769
      %v771 = vpop.xlane.xlu0 %770
      %v772 = vrcp.pop 6.0
      %v773 = vmul.f32 %v762, %v772
      %v774 = vmul.f32 %v765, %v772
      %v775 = vmul.f32 %v768, %v772
      %v776 = vmul.f32 %v771, %v772
      %v777 = vsub.f32 %v743, %v773
      %v778 = vsub.f32 %v744, %v774
      %v779 = vsub.f32 %v745, %v775
      %v780 = vsub.f32 %v746, %v776
      %785 = vrot.lane.b32.xlu0 %v777, 127
      %v786 = vpop.permute.xlu0 %785
      %787 = vrot.lane.b32.xlu0 %v778, 127
      %v788 = vpop.permute.xlu0 %787
      %789 = vrot.lane.b32.xlu0 %v779, 127
      %v790 = vpop.permute.xlu0 %789
      %791 = vrot.lane.b32.xlu0 %v780, 127
      %v792 = vpop.permute.xlu0 %791
      %797 = vst.msk [vmem:[%s334] sm:$0xff] %vm759, %v786
      %798 = vst.msk [vmem:[%s334 + $0x8] sm:$0xff] %vm759, %v788
      %799 = vst.msk [vmem:[%s334 + $0x10] sm:$0xff] %vm759, %v790
      %800 = vst.msk [vmem:[%s334 + $0x18] sm:$0xff] %vm759, %v792
      %s801 = smul.u32 4, %s20
      %p802 = scmp.lt.s32.totalorder %s801, 11
      %s803 = scalar_select %p802, %s801, 11
      %s804 = smul.addr %s803, 8
      %s805 = scalar_lea.vmem %s9, %s804
      // Predicated region
      $region57: #{dueling_dqn_forward.1} parent=55 // pred_check
        %p806 = pneg %p232
      $region58: #{dueling_dqn_forward.1} parent=55 // pred_check_branch
        %808 = sbr.rel (%p806) target = $region60
      $region59: #{dueling_dqn_forward.1} parent=55 // pred_region
        %s809 = smul.u32 4, %s20
      $region60: #{dueling_dqn_forward.1} parent=55 // pred_fallthru
        _
    $region56: #{dueling_dqn_forward.1} parent=5 // pred_fallthru
      _
    %p810 = scmp.le.s32.totalorder 2, %s15
    // Predicated region
    $region61: #{dueling_dqn_forward.1} parent=5 // pred_check
      %p811 = pneg %p810
    $region62: #{dueling_dqn_forward.1} parent=5 // pred_check_branch
      %813 = sbr.rel (%p811) target = $region64
    $region63: #{dueling_dqn_forward.1} parent=5 // pred_region
      %s814 = ssub.s32 %s15, 2
      // Predicated region
      $region65: #{dueling_dqn_forward.1} parent=63 // pred_check
        %p815 = pneg %p238
      $region66: #{dueling_dqn_forward.1} parent=63 // pred_check_branch
        %817 = sbr.rel (%p815) target = $region68
      $region67: #{dueling_dqn_forward.1} parent=63 // pred_region
        %s818 = smul.u32 4, %s21
        %p819 = scmp.lt.s32.totalorder %s818, 11
        %s820 = scalar_select %p819, %s818, 11
        %s821 = smul.addr %s820, 8
        %s822 = scalar_lea.vmem %s9, %s821
      $region68: #{dueling_dqn_forward.1} parent=63 // pred_fallthru
        _
    $region64: #{dueling_dqn_forward.1} parent=5 // pred_fallthru
      _
  $region6: #{dueling_dqn_forward.1} parent=0 // loop_footer
    %s19 = sadd.s32 1, %s15
  $region7: #{dueling_dqn_forward.1} parent=0 // loop_footer_branch
    %14 = sbr.rel target = $region3
  $region8: #{dueling_dqn_forward.1} parent=0 // loop_exit
    _

</llo_original>
